<compile_context>
chip_gen: v7x
topology: tpu7x:2x2x1
jax: 0.10.0
libtpu: 0.0.40
codegen_flags: <defaults>
</compile_context>

<pallas_src>
import jax
import jax.numpy as jnp
from jax.experimental import pallas as pl
from jax.experimental.pallas import tpu as pltpu


def _copy_kernel(x_ref, o_ref):
    # Pure lane-dense identity copy; the flatten happened (for free) in the
    # wrapper's metadata reshapes.  Keep the body bare: the kernel is purely
    # DMA/HBM bound, so VMEM is best spent on bigger blocks, not extra work.
    o_ref[...] = x_ref[...]


def _divisors(q):
    """All divisors of q (q >= 1), ascending."""
    ds = []
    i = 1
    while i * i <= q:
        if q % i == 0:
            ds.append(i)
            if i != q // i:
                ds.append(q // i)
        i += 1
    return sorted(ds)


def _budgets():
    """Generation-aware (target_block_bytes, vmem_limit_bytes)."""
    vmem_cap = 64 * 1024 * 1024  # conservative default: v7x per-TC VMEM
    try:
        info = pltpu.get_tpu_info()
        cap = getattr(info, "vmem_capacity_bytes", None)
        if cap:
            vmem_cap = int(cap)
    except Exception:
        pass
    # ~8 MiB blocks; the pipeline holds 2 arrays x 2 buffers = 4 blocks
    # (~32 MiB), which fits v7x's 64 MiB VMEM and v5e/v6e's 128 MiB with
    # headroom, while amortizing the ~0.35 us fixed per-grid-step overhead.
    target_block_bytes = max(1 << 20, min(8 << 20, vmem_cap // 8))
    vmem_limit_bytes = min(vmem_cap * 3 // 4, 4 * target_block_bytes + (8 << 20))
    return target_block_bytes, vmem_limit_bytes


def _lane_dense_shape(total, sub, itemsize, target_block_bytes):
    """Pick (R, C) with R*C == total and C a multiple of 128, preferring
    fully packed sublane tiles (R % sub == 0) and wide-but-balanced lanes."""
    q = total // 128
    # Cap C so a (sub, C) block still fits the byte budget -> keeps the view
    # splittable along rows (grid parallelism) and reasonably balanced.
    max_c = max(128, (target_block_bytes // max(1, sub * itemsize)) // 128 * 128)
    best_key, best = None, None
    for g in _divisors(q):
        c = 128 * g
        r = q // g
        tier = 2 if (r % sub == 0) else (1 if r >= sub else 0)
        key = (tier, c <= max_c, c)
        if best_key is None or key > best_key:
            best_key, best = key, (r, c)
    return best


def _choose_block(R, C, sub, itemsize, target_block_bytes):
    """Block (tb, tc): lane-dense, sublane-packed, dividing (R, C) exactly
    whenever the shape allows, sized to ~target_block_bytes."""
    if R * C * itemsize <= target_block_bytes:
        return R, C  # whole array in one block (full dims are always legal)

    # Column tile: largest multiple-of-128 divisor of C that still leaves
    # room for at least `sub` rows within the byte budget.
    col_budget = max(128, target_block_bytes // max(1, sub * itemsize))
    tc = None
    if C % 128 == 0:
        for g in _divisors(C // 128):
            c = 128 * g
            if c <= col_budget and (tc is None or c > tc):
                tc = c
    if tc is None:
        # Odd column count: take it whole if it fits, else a multiple of 128
        # (ragged last column block handled by Pallas masking).
        tc = C if C <= col_budget else (col_budget // 128) * 128

    # Row tile: largest multiple of the sublane pack within the budget,
    # preferring exact divisors of R (no ragged edge).
    rows_budget = max(sub, target_block_bytes // max(1, tc * itemsize))
    tb = None
    if R % sub == 0:
        for g in _divisors(R // sub):
            r = sub * g
            if r <= rows_budget and (tb is None or r > tb):
                tb = r
    if tb is None:
        tb = R if R <= sub else (min(rows_budget, R) // sub) * sub
    return tb, tc


def flatten(x):
    """Pallas equivalent of x.reshape(x.shape[0], -1) (torch Flatten)."""
    n = x.shape[0]
    flat = 1
    for d in x.shape[1:]:
        flat *= d
    total = n * flat
    if total == 0:
        # Degenerate empty tensor: the metadata reshape is the whole op.
        return jnp.reshape(x, (n, flat))

    itemsize = jnp.dtype(x.dtype).itemsize
    sub = max(8, 32 // itemsize)  # sublane pack: 8 f32, 16 bf16, 32 int8/fp8
    target_block_bytes, vmem_limit_bytes = _budgets()

    # Lane-dense re-chunk of the contiguous data (free metadata reshape):
    # avoids sublane-sparse tiles (e.g. batch=2 using 2 of 8 sublanes) and
    # sub-128-lane masked stores.  Falls back to the (n, flat) view when the
    # element count is not a multiple of 128 (correctness preserved by
    # Pallas masking of ragged edge blocks).
    if total % 128 == 0:
        R, C = _lane_dense_shape(total, sub, itemsize, target_block_bytes)
    else:
        R, C = n, flat
    view = jnp.reshape(x, (R, C))

    tb, tc = _choose_block(R, C, sub, itemsize, target_block_bytes)
    grid = (pl.cdiv(R, tb), pl.cdiv(C, tc))

    out2d = pl.pallas_call(
        _copy_kernel,
        out_shape=jax.ShapeDtypeStruct((R, C), view.dtype),
        grid_spec=pltpu.PrefetchScalarGridSpec(
            num_scalar_prefetch=0,
            grid=grid,
            in_specs=[pl.BlockSpec((tb, tc), lambda i, j: (i, j))],
            out_specs=pl.BlockSpec((tb, tc), lambda i, j: (i, j)),
        ),
        compiler_params=pltpu.CompilerParams(
            dimension_semantics=("parallel", "parallel"),
            vmem_limit_bytes=vmem_limit_bytes,
        ),
        cost_estimate=pl.CostEstimate(
            flops=0,
            transcendentals=0,
            bytes_accessed=2 * total * itemsize,
        ),
        # Output reuses the input HBM buffer: halves peak footprint and lets
        # XLA donate the input when the caller jits with donation.
        input_output_aliases={0: 0},
    )(view)

    # Free metadata reshape back to the Flatten output shape.
    return jnp.reshape(out2d, (n, flat))


if __name__ == "__main__":
    key = jax.random.PRNGKey(0)
    x = jax.random.normal(key, (2, 4, 16, 16), dtype=jnp.float32)

    out = flatten(x)
    jax.block_until_ready(out)

    # Verify against plain JAX reshape (same semantics as torch.reshape).
    ref = x.reshape(x.shape[0], -1)
    assert out.shape == (2, 4 * 16 * 16), out.shape
    assert out.dtype == x.dtype
    assert jnp.array_equal(out, ref), "mismatch vs reference reshape"

    print("KERNEL_OK")
</pallas_src>

<mosaic_0001>
module attributes {stable_mosaic.version = 11 : i64} {
  func.func @_copy_kernel(%arg0: i32, %arg1: i32, %arg2: memref<8x256xf32, #tpu.memory_space<vmem>>, %arg3: memref<8x256xf32, #tpu.memory_space<vmem>>) attributes {dimension_semantics = [#tpu.dimension_semantics<parallel>, #tpu.dimension_semantics<parallel>], iteration_bounds = array<i64: 1, 1>, scalar_prefetch = 0 : i64, scratch_operands = 0 : i64, tpu.core_type = #tpu.core_type<tc>, window_params = [{transform_indices = @transform_0, window_bounds = array<i64: 8, 256>}, {transform_indices = @transform_1, window_bounds = array<i64: 8, 256>}]} {
    %c0 = arith.constant 0 : index
    %c0_0 = arith.constant 0 : index
    %0 = vector.load %arg2[%c0, %c0_0] : memref<8x256xf32, #tpu.memory_space<vmem>>, vector<8x256xf32>
    %c0_1 = arith.constant 0 : index
    %c0_2 = arith.constant 0 : index
    %1 = vector.load %arg3[%c0_1, %c0_2] : memref<8x256xf32, #tpu.memory_space<vmem>>, vector<8x256xf32>
    tpu.vector_store %arg3[%c0_1, %c0_2], %0 {strides = array<i32>} : memref<8x256xf32, #tpu.memory_space<vmem>>, vector<8x256xf32>,
    return
  }
  func.func @transform_0(%arg0: i32, %arg1: i32) -> (i32, i32) {
    %c0_i32 = arith.constant 0 : i32
    return %arg0, %arg1 : i32, i32
  }
  func.func @transform_1(%arg0: i32, %arg1: i32) -> (i32, i32) {
    %c0_i32 = arith.constant 0 : i32
    return %arg0, %arg1 : i32, i32
  }
}

</mosaic_0001>

<llo_original>
// kernel: tpu_custom_call.1
$region0: #{tpu_custom_call.1}
  #allocation0 [shape = 'u32[]', space=smem, size = 0x4, offset = 0x4, fixed_abs, tag = 'smem constant byte address 0x4 - core index']
  #allocation1 [shape = 'u32[144,128]{1,0:T(1,128)}', space=vmem, size = 0x12000, scoped, tag = 'internal scratch']
  %s0 = inlined_call_operand.hbm [shape: f32[8,256], index: 0, kind: input, shape index: {}, may-alias: {0,1}]
  %s1 = inlined_call_operand.hbm [shape: f32[8,256], index: 1, kind: output, shape index: {}, may-alias: {0,1}]
  %s2 = sld [smem:[#allocation0]]
  $region18: #{tpu_custom_call.1} parent=0
    _
  %s4 = ssub.s32 1, %s2
  %s5 = scalar_select 0, %s4, %s2
  $region1: #{tpu_custom_call.1} parent=0
    #allocation2 [shape = 'u8[8192]{0}', space=vmem, size = 0x2000, scoped, tag = 'input window, operand 0, single buffered']
    #allocation3 [shape = 's32[1]{0}', space=sflag, size = 0x4, scoped, tag = 'scoped memory for tpu_custom_call.1']
    #allocation4 [shape = 's32[1]{0}', space=sflag, size = 0x4, scoped, tag = 'scoped memory for tpu_custom_call.1']
    #allocation5 [shape = 'u8[8192]{0}', space=vmem, size = 0x2000, scoped, tag = 'output window, operand 0, single buffered']
    %6 = vsyncpa [#allocation3], 0
    %7 = vsyncpa [#allocation4], 0
    // Predicated region
    $region2: #{tpu_custom_call.1} parent=1 // pred_check
      _
    $region3: #{tpu_custom_call.1} parent=1 // pred_check_branch
      %9 = sbr.rel (0) target = $region5
    $region4: #{tpu_custom_call.1} parent=1 // pred_region
      %s11 = ssub.s32 256, 256
      %12 = vsyncadd [#allocation3], %s11
      %s14 = sshll.u32 [#allocation2], 4
      %s15 = int_to_ptr.vmem [resolvable:$true] %s14
      %17 = dma.hbm_to_vmem [thread:$0]  %s0, 256, %s15, [#allocation3]
    $region5: #{tpu_custom_call.1} parent=1 // pred_fallthru
      _
    // Predicated region
    $region6: #{tpu_custom_call.1} parent=1 // pred_check
      _
    $region7: #{tpu_custom_call.1} parent=1 // pred_check_branch
      %19 = sbr.rel (0) target = $region9
    $region8: #{tpu_custom_call.1} parent=1 // pred_region
      %20 = dma.done [#allocation3], 256
    $region9: #{tpu_custom_call.1} parent=1 // pred_fallthru
      _
    %v21 = vld [vmem:[#allocation2] sm:$0xff]
    %v22 = vld [vmem:[#allocation2 + $0x8] sm:$0xff]
    %23 = vst [vmem:[#allocation5] sm:$0xff] %v21
    %24 = vst [vmem:[#allocation5 + $0x8] sm:$0xff] %v22
    // Predicated region
    $region10: #{tpu_custom_call.1} parent=1 // pred_check
      _
    $region11: #{tpu_custom_call.1} parent=1 // pred_check_branch
      %26 = sbr.rel (0) target = $region13
    $region12: #{tpu_custom_call.1} parent=1 // pred_region
      %s28 = ssub.s32 256, 256
      %29 = vsyncadd [#allocation4], %s28
      %s31 = sshll.u32 [#allocation5], 4
      %s32 = int_to_ptr.vmem [resolvable:$true] %s31
      %34 = dma.vmem_to_hbm [thread:$0]  %s32, 256, %s1, [#allocation4]
    $region13: #{tpu_custom_call.1} parent=1 // pred_fallthru
      _
    // Predicated region
    $region14: #{tpu_custom_call.1} parent=1 // pred_check
      _
    $region15: #{tpu_custom_call.1} parent=1 // pred_check_branch
      %36 = sbr.rel (0) target = $region17
    $region16: #{tpu_custom_call.1} parent=1 // pred_region
      %37 = dma.done [#allocation4], 256
    $region17: #{tpu_custom_call.1} parent=1 // pred_fallthru
      _
    %38 = vsyncpa [#allocation3], 1
    %39 = vsyncpa [#allocation4], 1

</llo_original>
